<compile_context>
chip_gen: v7x
topology: tpu7x:2x2x1
jax: 0.10.0
libtpu: 0.0.40
codegen_flags: <defaults>
</compile_context>

<pallas_src>
import jax
import jax.numpy as jnp
from jax.experimental import pallas as pl
from jax.experimental.pallas import tpu as pltpu


# ----------------------------------------------------------------------------
# Single-step kernel: softmax(x @ W, axis=0)   (bias cancels under axis-0 softmax)
# ----------------------------------------------------------------------------
def decoder_kernel(x_ref, w_ref, o_ref):
    # fc4 matmul on the MXU, f32 accumulation.
    y = jnp.dot(x_ref[...], w_ref[...], preferred_element_type=jnp.float32)

    # Numerically-stable softmax over axis=0 (batch axis), per column.
    m = jnp.max(y, axis=0, keepdims=True)            # (1, OUT)
    e = jnp.exp(y - m)                               # (B, OUT)
    s = jnp.sum(e, axis=0, keepdims=True)            # (1, OUT)
    o_ref[...] = (e * pl.reciprocal(s, approx=False)).astype(o_ref.dtype)


@jax.jit
def decoder_forward(x, w, b=None):
    """Decoder forward: softmax(fc4(x), axis=0).

    `b` is accepted for parity with torch.nn.Linear but ignored: a per-column
    bias is constant along axis=0 and cancels exactly in the axis-0 softmax.
    """
    del b
    B, IN = x.shape
    OUT = w.shape[1]
    itemsize = jnp.dtype(x.dtype).itemsize

    cost = pl.CostEstimate(
        flops=2 * B * IN * OUT,
        transcendentals=B * OUT,
        bytes_accessed=(B * IN + IN * OUT + B * OUT) * itemsize,
    )

    return pl.pallas_call(
        decoder_kernel,
        out_shape=jax.ShapeDtypeStruct((B, OUT), x.dtype),
        in_specs=[
            pl.BlockSpec(memory_space=pltpu.MemorySpace.VMEM),   # x (B, IN)
            pl.BlockSpec(memory_space=pltpu.MemorySpace.VMEM),   # W (IN, OUT)
        ],
        out_specs=pl.BlockSpec(memory_space=pltpu.MemorySpace.VMEM),
        cost_estimate=cost,
    )(x, w)


# ----------------------------------------------------------------------------
# Batched multi-step kernel: T independent decode steps in one call.
# Segmented softmax: reduce over each step's own batch axis (axis=1 of (T,B,OUT)),
# preserving the per-call axis-0 semantics of the original module.
# ----------------------------------------------------------------------------
def decoder_steps_kernel(x_ref, w_ref, o_ref):
    # (T, B, IN) @ (IN, OUT) -> (T, B, OUT), f32 accumulation on the MXU.
    y = jnp.einsum("tbi,io->tbo", x_ref[...], w_ref[...],
                   preferred_element_type=jnp.float32)

    m = jnp.max(y, axis=1, keepdims=True)            # (T, 1, OUT)
    e = jnp.exp(y - m)                               # (T, B, OUT)
    s = jnp.sum(e, axis=1, keepdims=True)            # (T, 1, OUT)
    o_ref[...] = (e * pl.reciprocal(s, approx=False)).astype(o_ref.dtype)


@jax.jit
def decoder_forward_steps(xs, w, b=None):
    """Batched decoder forward over T stacked steps: xs is (T, B, IN).

    Equivalent to stacking [softmax(fc4(xs[t]), axis=0) for t in range(T)],
    but amortizes launch overhead and the weight DMA over all T steps.
    """
    del b
    T, B, IN = xs.shape
    OUT = w.shape[1]
    itemsize = jnp.dtype(xs.dtype).itemsize

    cost = pl.CostEstimate(
        flops=2 * T * B * IN * OUT,
        transcendentals=T * B * OUT,
        bytes_accessed=(T * B * IN + IN * OUT + T * B * OUT) * itemsize,
    )

    return pl.pallas_call(
        decoder_steps_kernel,
        out_shape=jax.ShapeDtypeStruct((T, B, OUT), xs.dtype),
        in_specs=[
            pl.BlockSpec(memory_space=pltpu.MemorySpace.VMEM),   # xs (T, B, IN)
            pl.BlockSpec(memory_space=pltpu.MemorySpace.VMEM),   # W  (IN, OUT)
        ],
        out_specs=pl.BlockSpec(memory_space=pltpu.MemorySpace.VMEM),
        cost_estimate=cost,
    )(xs, w)


if __name__ == "__main__":
    B = 8            # batch
    IN = 300         # fc4 input features (fixed by the module)
    OUT = 32         # output_size

    key = jax.random.PRNGKey(0)
    kx, kw, kb, kt = jax.random.split(key, 4)

    # Deterministic synthetic parameters (shapes from torch.nn.Linear(300, OUT)).
    x = jax.random.normal(kx, (B, IN), dtype=jnp.float32)
    w = jax.random.normal(kw, (IN, OUT), dtype=jnp.float32) * 0.05
    b = jax.random.normal(kb, (OUT,), dtype=jnp.float32) * 0.05

    # --- single-step path (the module's forward) ---
    out = jax.block_until_ready(decoder_forward(x, w, b))
    # Pure-JAX reference WITH the bias — must still match (bias cancels).
    ref = jax.nn.softmax(x @ w + b[None, :], axis=0)
    assert out.shape == (B, OUT)
    assert jnp.allclose(out, ref, atol=1e-5, rtol=1e-5)

    # --- batched multi-step path (amortizes launch + weight DMA) ---
    T = 4
    xs = jax.random.normal(kt, (T, B, IN), dtype=jnp.float32)
    outs = jax.block_until_ready(decoder_forward_steps(xs, w, b))
    refs = jax.nn.softmax(jnp.einsum("tbi,io->tbo", xs, w) + b[None, None, :], axis=1)
    assert outs.shape == (T, B, OUT)
    assert jnp.allclose(outs, refs, atol=1e-5, rtol=1e-5)

    print("KERNEL_OK")
</pallas_src>

<mosaic_0001>
module attributes {stable_mosaic.version = 11 : i64} {
  func.func @decoder_kernel(%arg0: memref<8x300xf32, #tpu.memory_space<vmem>>, %arg1: memref<300x32xf32, #tpu.memory_space<vmem>>, %arg2: memref<8x32xf32, #tpu.memory_space<vmem>>) attributes {dimension_semantics = [], scalar_prefetch = 0 : i64, scratch_operands = 0 : i64, tpu.core_type = #tpu.core_type<tc>} {
    %c0 = arith.constant 0 : index
    %c0_0 = arith.constant 0 : index
    %0 = vector.load %arg0[%c0, %c0_0] : memref<8x300xf32, #tpu.memory_space<vmem>>, vector<8x300xf32>
    %c0_1 = arith.constant 0 : index
    %c0_2 = arith.constant 0 : index
    %1 = vector.load %arg1[%c0_1, %c0_2] : memref<300x32xf32, #tpu.memory_space<vmem>>, vector<300x32xf32>
    %cst = arith.constant dense<0.000000e+00> : vector<8x32xf32>
    %2 = tpu.matmul %0, %1, %cst {dimension_numbers = #tpu.dot_dimension_numbers<[1], [0], [0], [1], [0, 0, 1, 1], [], []>} : vector<8x300xf32>, vector<300x32xf32>, vector<8x32xf32> -> vector<8x32xf32>
    %cst_3 = arith.constant dense<0xFF800000> : vector<32xf32>
    %3 = vector.multi_reduction <maximumf>, %2, %cst_3 [0] : vector<8x32xf32> to vector<32xf32>
    %4 = vector.shape_cast %3 : vector<32xf32> to vector<1x32xf32>
    %5 = vector.broadcast %4 : vector<1x32xf32> to vector<8x32xf32>
    %6 = arith.subf %2, %5 : vector<8x32xf32>
    %7 = math.exp %6 : vector<8x32xf32>
    %cst_4 = arith.constant dense<0.000000e+00> : vector<32xf32>
    %8 = vector.multi_reduction <add>, %7, %cst_4 [0] : vector<8x32xf32> to vector<32xf32>
    %9 = vector.shape_cast %8 : vector<32xf32> to vector<1x32xf32>
    %10 = tpu.reciprocal %9 : vector<1x32xf32> -> vector<1x32xf32>
    %11 = vector.broadcast %10 : vector<1x32xf32> to vector<8x32xf32>
    %12 = arith.mulf %7, %11 : vector<8x32xf32>
    %c0_5 = arith.constant 0 : index
    %c0_6 = arith.constant 0 : index
    %13 = vector.load %arg2[%c0_5, %c0_6] : memref<8x32xf32, #tpu.memory_space<vmem>>, vector<8x32xf32>
    tpu.vector_store %arg2[%c0_5, %c0_6], %12 {strides = array<i32>} : memref<8x32xf32, #tpu.memory_space<vmem>>, vector<8x32xf32>,
    return
  }
}

</mosaic_0001>

<llo_original>
// kernel: decoder_forward.1
$region0: #{decoder_forward.1}
  #allocation0 [shape = 'u32[]', space=smem, size = 0x4, offset = 0x4, fixed_abs, tag = 'smem constant byte address 0x4 - core index']
  #allocation1 [shape = 'u32[144,128]{1,0:T(1,128)}', space=vmem, size = 0x12000, scoped, tag = 'internal scratch']
  %s0 = inlined_call_operand.vmem [shape: f32[8,300], index: 0, kind: input, shape index: {}]
  %s1 = inlined_call_operand.vmem [shape: f32[300,32], index: 1, kind: input, shape index: {}]
  %s2 = inlined_call_operand.hbm [shape: f32[8,32], index: 2, kind: output, shape index: {}]
  %s3 = sld [smem:[#allocation0]]
  $region18: #{decoder_forward.1} parent=0
    _
  %s5 = ssub.s32 1, %s3
  %s6 = scalar_select 0, %s5, %s3
  $region1: #{decoder_forward.1} parent=0
    #allocation2 [shape = 'u8[4096]{0}', space=vmem, size = 0x1000, scoped, tag = 'output window, operand 0, single buffered']
    #allocation3 [shape = 's32[1]{0}', space=sflag, size = 0x4, scoped, tag = 'scoped memory for decoder_forward.1']
    %7 = vsyncpa [#allocation3], 0
    // Predicated region
    $region2: #{decoder_forward.1} parent=1 // pred_check
      _
    $region3: #{decoder_forward.1} parent=1 // pred_check_branch
      %9 = sbr.rel (0) target = $region5
    $region4: #{decoder_forward.1} parent=1 // pred_region
      _
    $region5: #{decoder_forward.1} parent=1 // pred_fallthru
      _
    // Predicated region
    $region6: #{decoder_forward.1} parent=1 // pred_check
      _
    $region7: #{decoder_forward.1} parent=1 // pred_check_branch
      %11 = sbr.rel (0) target = $region9
    $region8: #{decoder_forward.1} parent=1 // pred_region
      _
    $region9: #{decoder_forward.1} parent=1 // pred_fallthru
      _
    %v12 = vld [vmem:[%s0] sm:$0xff]
    %v13 = vld [vmem:[%s0 + $0x8] sm:$0xff]
    %v14 = vld [vmem:[%s0 + $0x10] sm:$0xff]
    %v15 = vld [vmem:[%s1] sm:$0xff]
    %v16 = vld [vmem:[%s1 + $0x8] sm:$0xff]
    %v17 = vld [vmem:[%s1 + $0x10] sm:$0xff]
    %v18 = vld [vmem:[%s1 + $0x18] sm:$0xff]
    %v19 = vld [vmem:[%s1 + $0x20] sm:$0xff]
    %v20 = vld [vmem:[%s1 + $0x28] sm:$0xff]
    %v21 = vld [vmem:[%s1 + $0x30] sm:$0xff]
    %v22 = vld [vmem:[%s1 + $0x38] sm:$0xff]
    %v23 = vld [vmem:[%s1 + $0x40] sm:$0xff]
    %v24 = vld [vmem:[%s1 + $0x48] sm:$0xff]
    %v25 = vld [vmem:[%s1 + $0x50] sm:$0xff]
    %v26 = vld [vmem:[%s1 + $0x58] sm:$0xff]
    %v27 = vld [vmem:[%s1 + $0x60] sm:$0xff]
    %v28 = vld [vmem:[%s1 + $0x68] sm:$0xff]
    %v29 = vld [vmem:[%s1 + $0x70] sm:$0xff]
    %v30 = vld [vmem:[%s1 + $0x78] sm:$0xff]
    %v31 = vld [vmem:[%s1 + $0x80] sm:$0xff]
    %v32 = vld [vmem:[%s1 + $0x88] sm:$0xff]
    %v33 = vld [vmem:[%s1 + $0x90] sm:$0xff]
    %v34 = vld [vmem:[%s1 + $0x98] sm:$0xff]
    %v35 = vld [vmem:[%s1 + $0xa0] sm:$0xff]
    %v36 = vld [vmem:[%s1 + $0xa8] sm:$0xff]
    %v37 = vld [vmem:[%s1 + $0xb0] sm:$0xff]
    %v38 = vld [vmem:[%s1 + $0xb8] sm:$0xff]
    %v39 = vld [vmem:[%s1 + $0xc0] sm:$0xff]
    %v40 = vld [vmem:[%s1 + $0xc8] sm:$0xff]
    %v41 = vld [vmem:[%s1 + $0xd0] sm:$0xff]
    %v42 = vld [vmem:[%s1 + $0xd8] sm:$0xff]
    %v43 = vld [vmem:[%s1 + $0xe0] sm:$0xff]
    %v44 = vld [vmem:[%s1 + $0xe8] sm:$0xff]
    %v45 = vld [vmem:[%s1 + $0xf0] sm:$0xff]
    %v46 = vld [vmem:[%s1 + $0xf8] sm:$0xff]
    %v47 = vld [vmem:[%s1 + $0x100] sm:$0xff]
    %v48 = vld [vmem:[%s1 + $0x108] sm:$0xff]
    %v49 = vld [vmem:[%s1 + $0x110] sm:$0xff]
    %v50 = vld [vmem:[%s1 + $0x118] sm:$0xff]
    %v51 = vld [vmem:[%s1 + $0x120] sm:$0xff]
    %v52 = vld [vmem:[%s1 + $0x128] sm:$0xf]
    %vm53 = vcmask 359424
    %v55 = vsel %vm53, %v14, 0
    %vm57 = vcmask 1043456
    %v59 = vsel %vm57, %v52, 0
    %61 = vmatprep.subr.mxu0 0.0
    %62 = vmatpush1.msra.mxu0 %v15
    %63 = vmatprep.subr.mxu0 0.0
    %64 = vmatpush1.msra.mxu0 %v16
    %65 = vmatprep.subr.mxu0 0.0
    %66 = vmatpush1.msra.mxu0 %v17
    %67 = vmatprep.subr.mxu0 0.0
    %68 = vmatpush1.msra.mxu0 %v18
    %69 = vmatprep.subr.mxu0 0.0
    %70 = vmatpush1.msra.mxu0 %v19
    %71 = vmatprep.subr.mxu0 0.0
    %72 = vmatpush1.msra.mxu0 %v20
    %73 = vmatprep.subr.mxu0 0.0
    %74 = vmatpush1.msra.mxu0 %v21
    %75 = vmatprep.subr.mxu0 0.0
    %76 = vmatpush1.msra.mxu0 %v22
    %77 = vmatprep.subr.mxu0 0.0
    %78 = vmatpush1.msra.mxu0 %v23
    %79 = vmatprep.subr.mxu0 0.0
    %80 = vmatpush1.msra.mxu0 %v24
    %81 = vmatprep.subr.mxu0 0.0
    %82 = vmatpush1.msra.mxu0 %v25
    %83 = vmatprep.subr.mxu0 0.0
    %84 = vmatpush1.msra.mxu0 %v26
    %85 = vmatprep.subr.mxu0 0.0
    %86 = vmatpush1.msra.mxu0 %v27
    %87 = vmatprep.subr.mxu0 0.0
    %88 = vmatpush1.msra.mxu0 %v28
    %89 = vmatprep.subr.mxu0 0.0
    %90 = vmatpush1.msra.mxu0 %v29
    %91 = vmatprep.subr.mxu0 0.0
    %92 = vmatpush1.msra.mxu0 %v30
    %93 = vmatprep.subr.mxu0 0.0
    %94 = vmatpush1.msra.mxu0 %v31
    %95 = vmatprep.subr.mxu0 0.0
    %96 = vmatpush1.msra.mxu0 %v32
    %97 = vmatprep.subr.mxu0 0.0
    %98 = vmatpush1.msra.mxu0 %v33
    %99 = vmatprep.subr.mxu0 0.0
    %100 = vmatpush1.msra.mxu0 %v34
    %101 = vmatprep.subr.mxu0 0.0
    %102 = vmatpush1.msra.mxu0 %v35
    %103 = vmatprep.subr.mxu0 0.0
    %104 = vmatpush1.msra.mxu0 %v36
    %105 = vmatprep.subr.mxu0 0.0
    %106 = vmatpush1.msra.mxu0 %v37
    %107 = vmatprep.subr.mxu0 0.0
    %108 = vmatpush1.msra.mxu0 %v38
    %109 = vmatprep.subr.mxu0 0.0
    %110 = vmatpush1.msra.mxu0 %v39
    %111 = vmatprep.subr.mxu0 0.0
    %112 = vmatpush1.msra.mxu0 %v40
    %113 = vmatprep.subr.mxu0 0.0
    %114 = vmatpush1.msra.mxu0 %v41
    %115 = vmatprep.subr.mxu0 0.0
    %116 = vmatpush1.msra.mxu0 %v42
    %117 = vmatprep.subr.mxu0 0.0
    %118 = vmatpush1.msra.mxu0 %v43
    %119 = vmatprep.subr.mxu0 0.0
    %120 = vmatpush1.msra.mxu0 %v44
    %121 = vmatprep.subr.mxu0 0.0
    %122 = vmatpush1.msra.mxu0 %v45
    %123 = vmatprep.subr.mxu0 0.0
    %124 = vmatpush1.msra.mxu0 %v46
    %125 = vmatprep.mubr.f32.mxu0 %v13
    %126 = vmatmul.mubr.f32.gmra.mrb[0].mxu0 %v12
    %v127 = vpop.f32.mrb[0].mxu0
    %v128 = vadd.f32 0.0, %v127
    %v129 = vpop.f32.mrb[0].mxu0
    %130 = vdwg.mxu0
    %131 = vmatprep.subr.mxu0 0.0
    %132 = vmatpush1.msra.mxu0 %v47
    %133 = vmatprep.subr.mxu0 0.0
    %134 = vmatpush1.msra.mxu0 %v48
    %135 = vmatprep.subr.mxu0 0.0
    %136 = vmatpush1.msra.mxu0 %v49
    %137 = vmatprep.subr.mxu0 0.0
    %138 = vmatpush1.msra.mxu0 %v50
    %139 = vmatprep.subr.mxu0 0.0
    %140 = vmatpush1.msra.mxu0 %v51
    %141 = vmatprep.subr.mxu0 0.0
    %142 = vmatpush1.msra.mxu0 %v59
    %143 = vmatprep.subr.mxu0 0.0
    %144 = vmatpush1.msra.mxu0 0.0
    %145 = vmatprep.subr.mxu0 0.0
    %146 = vmatpush1.msra.mxu0 0.0
    %147 = vmatprep.subr.mxu0 0.0
    %148 = vmatpush1.msra.mxu0 0.0
    %149 = vmatprep.subr.mxu0 0.0
    %150 = vmatpush1.msra.mxu0 0.0
    %151 = vmatprep.subr.mxu0 0.0
    %152 = vmatpush1.msra.mxu0 0.0
    %153 = vmatprep.subr.mxu0 0.0
    %154 = vmatpush1.msra.mxu0 0.0
    %155 = vmatprep.subr.mxu0 0.0
    %156 = vmatpush1.msra.mxu0 0.0
    %157 = vmatprep.subr.mxu0 0.0
    %158 = vmatpush1.msra.mxu0 0.0
    %159 = vmatprep.subr.mxu0 0.0
    %160 = vmatpush1.msra.mxu0 0.0
    %161 = vmatprep.subr.mxu0 0.0
    %162 = vmatpush1.msra.mxu0 0.0
    %163 = vmatprep.subr.mxu0 0.0
    %164 = vmatpush1.msra.mxu0 0.0
    %165 = vmatprep.subr.mxu0 0.0
    %166 = vmatpush1.msra.mxu0 0.0
    %167 = vmatprep.subr.mxu0 0.0
    %168 = vmatpush1.msra.mxu0 0.0
    %169 = vmatprep.subr.mxu0 0.0
    %170 = vmatpush1.msra.mxu0 0.0
    %171 = vmatprep.subr.mxu0 0.0
    %172 = vmatpush1.msra.mxu0 0.0
    %173 = vmatprep.subr.mxu0 0.0
    %174 = vmatpush1.msra.mxu0 0.0
    %175 = vmatprep.subr.mxu0 0.0
    %176 = vmatpush1.msra.mxu0 0.0
    %177 = vmatprep.subr.mxu0 0.0
    %178 = vmatpush1.msra.mxu0 0.0
    %179 = vmatprep.subr.mxu0 0.0
    %180 = vmatpush1.msra.mxu0 0.0
    %181 = vmatprep.subr.mxu0 0.0
    %182 = vmatpush1.msra.mxu0 0.0
    %183 = vmatprep.subr.mxu0 0.0
    %184 = vmatpush1.msra.mxu0 0.0
    %185 = vmatprep.subr.mxu0 0.0
    %186 = vmatpush1.msra.mxu0 0.0
    %187 = vmatprep.subr.mxu0 0.0
    %188 = vmatpush1.msra.mxu0 0.0
    %189 = vmatprep.subr.mxu0 0.0
    %190 = vmatpush1.msra.mxu0 0.0
    %191 = vmatprep.subr.mxu0 0.0
    %192 = vmatpush1.msra.mxu0 0.0
    %193 = vmatprep.subr.mxu0 0.0
    %194 = vmatpush1.msra.mxu0 0.0
    %195 = vmatprep.mubr.f32.mxu0 0.0
    %196 = vmatmul.mubr.f32.gmra.mrb[0].mxu0 %v55
    %v197 = vpop.f32.mrb[0].mxu0
    %v198 = vadd.f32 %v128, %v197
    %v199 = vpop.f32.mrb[0].mxu0
    %200 = vdwg.mxu0
    %vm201 = vcmask 261120
    %v202 = vsel %vm201, %v198, -inf
    %v203 = vrot.slane %v202, 4
    %v204 = vmax.f32 %v202, %v203
    %v205 = vrot.slane %v204, 2
    %v206 = vmax.f32 %v204, %v205
    %v207 = vrot.slane %v206, 1
    %v208 = vmax.f32 %v206, %v207
    %v209 = vsub.f32 %v198, %v208
    %v210 = vmul.f32 %v209, 1.442695
    %v211 = vpow.pop %v210
    %v212 = vsel %vm201, %v211, 0.0
    %v213 = vrot.slane %v212, 4
    %v214 = vadd.f32 %v212, %v213
    %v215 = vrot.slane %v214, 2
    %v216 = vadd.f32 %v214, %v215
    %v217 = vrot.slane %v216, 1
    %v218 = vadd.f32 %v216, %v217
    %v219 = vrcp.pop %v218
    %v220 = vmul.f32 %v211, %v219
    %221 = vst.msk [vmem:[#allocation2] sm:$0xff] %vm201, %v220
    // Predicated region
    $region10: #{decoder_forward.1} parent=1 // pred_check
      _
    $region11: #{decoder_forward.1} parent=1 // pred_check_branch
      %223 = sbr.rel (0) target = $region13
    $region12: #{decoder_forward.1} parent=1 // pred_region
      %s225 = ssub.s32 128, 128
      %226 = vsyncadd [#allocation3], %s225
      %s228 = sshll.u32 [#allocation2], 4
      %s229 = int_to_ptr.vmem [resolvable:$true] %s228
      %231 = dma.vmem_to_hbm [thread:$0]  %s229, 128, %s2, [#allocation3]
    $region13: #{decoder_forward.1} parent=1 // pred_fallthru
      _
    // Predicated region
    $region14: #{decoder_forward.1} parent=1 // pred_check
      _
    $region15: #{decoder_forward.1} parent=1 // pred_check_branch
      %233 = sbr.rel (0) target = $region17
    $region16: #{decoder_forward.1} parent=1 // pred_region
      %234 = dma.done [#allocation3], 128
    $region17: #{decoder_forward.1} parent=1 // pred_fallthru
      _
    %235 = vsyncpa [#allocation3], 1

</llo_original>
